<compile_context>
chip_gen: v7x
topology: tpu7x:2x2x1
jax: 0.10.0
libtpu: 0.0.40
codegen_flags: <defaults>
</compile_context>

<pallas_src>
import jax
import jax.numpy as jnp
from jax.experimental import pallas as pl
from jax.experimental.pallas import tpu as pltpu

# ------------------------- problem sizes (small, synthetic) -------------------
B = 2            # batch
C_IN = 4         # input channels (PyTorch x: [B, C_IN, H, W])
H = 16
W = 16
C_FEAT = 128     # conv output channels == feature_dim (analog of 512)
N_CLASSES = 8    # analog of 1000 ImageNet classes
K_IM2COL = 9 * C_IN            # 36 contraction dim of the im2col matmul
N_PAD = 128                    # lane-dense padded logits width
HW = H * W                     # 256 rows per batch element


# ---------------- fused kernel: im2col-conv + ReLU + avg-pool + fc ------------
def fused_kernel(p_ref, w_ref, b_ref, wfc_ref, bfc_ref, logits_ref, feat_ref):
    # p_ref      : (1, HW, K_IM2COL)   im2col patches, one batch element
    # w_ref      : (K_IM2COL, C_FEAT)  conv weight reshaped for im2col
    # b_ref      : (1, C_FEAT)         conv bias (BN folded)
    # wfc_ref    : (C_FEAT, N_PAD)     fc weight, transposed + lane-padded
    # bfc_ref    : (1, N_PAD)          fc bias, lane-padded
    # logits_ref : (1, 1, N_PAD)
    # feat_ref   : (1, 1, C_FEAT)
    patches = p_ref[0]                                           # (HW, K)
    acc = jnp.dot(patches, w_ref[...],
                  preferred_element_type=jnp.float32)            # (HW, C_FEAT)
    acc = jnp.maximum(acc + b_ref[...], 0.0)                     # bias + ReLU

    # global average pool as a matmul against a constant 1/(HW) row vector
    pool = jnp.full((1, HW), 1.0 / HW, jnp.float32)
    feat = jnp.dot(pool, acc, preferred_element_type=jnp.float32)  # (1, C_FEAT)
    feat_ref[0] = feat

    # fc head, lane-dense (N_PAD = 128) output store
    logits_ref[0] = (jnp.dot(feat, wfc_ref[...],
                             preferred_element_type=jnp.float32)
                     + bfc_ref[...])                             # (1, N_PAD)


def fused_forward(patches, w_im2col, conv_b2, wfc_pad, bfc_pad):
    # patches: (B, HW, K_IM2COL) f32
    logits_pad, feat = pl.pallas_call(
        fused_kernel,
        out_shape=(
            jax.ShapeDtypeStruct((B, 1, N_PAD), jnp.float32),
            jax.ShapeDtypeStruct((B, 1, C_FEAT), jnp.float32),
        ),
        grid_spec=pltpu.PrefetchScalarGridSpec(
            num_scalar_prefetch=0,
            grid=(B,),
            in_specs=[
                pl.BlockSpec((1, HW, K_IM2COL), lambda i: (i, 0, 0)),
                pl.BlockSpec((K_IM2COL, C_FEAT), lambda i: (0, 0)),
                pl.BlockSpec((1, C_FEAT), lambda i: (0, 0)),
                pl.BlockSpec((C_FEAT, N_PAD), lambda i: (0, 0)),
                pl.BlockSpec((1, N_PAD), lambda i: (0, 0)),
            ],
            out_specs=[
                pl.BlockSpec((1, 1, N_PAD), lambda i: (i, 0, 0)),
                pl.BlockSpec((1, 1, C_FEAT), lambda i: (i, 0, 0)),
            ],
        ),
        # parallel batch axis -> both TensorCores used on v7x; on v5e/v6e this
        # is a cheap 2-step serial loop.
        compiler_params=pltpu.CompilerParams(
            dimension_semantics=("parallel",)),
    )(patches, w_im2col, conv_b2, wfc_pad, bfc_pad)
    return logits_pad, feat


# ------------------------------ module forward --------------------------------
def _im2col(x_nhwc):
    # (B, H, W, C_IN) -> zero-pad -> (B, HW, 9*C_IN), tap order (ki, kj, c)
    x_pad = jnp.pad(x_nhwc, ((0, 0), (1, 1), (1, 1), (0, 0)))
    taps = []
    for ki in range(3):
        for kj in range(3):
            taps.append(x_pad[:, ki:ki + H, kj:kj + W, :])       # (B, H, W, C_IN)
    patches = jnp.concatenate(taps, axis=-1)                      # (B, H, W, 9*C_IN)
    return patches.reshape(B, HW, K_IM2COL)


def custom_classifier_forward(x_nchw, params, return_features=False):
    # x_nchw: (B, C_IN, H, W) — same convention as the PyTorch module
    x_nhwc = jnp.transpose(x_nchw, (0, 2, 3, 1))                  # NCHW -> NHWC
    patches = _im2col(x_nhwc)                                     # lane-dense im2col

    # weight prep (glue, constant-foldable): conv HWIO -> im2col (9*C_IN, C_FEAT);
    # fc (N_CLASSES, C_FEAT) -> (C_FEAT, N_PAD) lane-padded.
    w_im2col = params["conv_w"].reshape(K_IM2COL, C_FEAT)
    conv_b2 = params["conv_b"].reshape(1, C_FEAT)
    wfc_pad = jnp.zeros((C_FEAT, N_PAD), jnp.float32).at[:, :N_CLASSES].set(
        params["fc_w"].T)
    bfc_pad = jnp.zeros((1, N_PAD), jnp.float32).at[:, :N_CLASSES].set(
        params["fc_b"].reshape(1, N_CLASSES))

    logits_pad, feat = fused_forward(patches, w_im2col, conv_b2, wfc_pad, bfc_pad)
    logits = logits_pad[:, 0, :N_CLASSES]
    feature = feat[:, 0, :]
    if return_features:
        return logits, feature
    return logits


# ------------------------------ reference (pure JAX) --------------------------
def reference_forward(x_nchw, params):
    x_nhwc = jnp.transpose(x_nchw, (0, 2, 3, 1))
    out = jax.lax.conv_general_dilated(
        x_nhwc, params["conv_w"],
        window_strides=(1, 1), padding="SAME",
        dimension_numbers=("NHWC", "HWIO", "NHWC"))
    out = jnp.maximum(out + params["conv_b"][None, None, None, :], 0.0)
    feat = jnp.mean(out, axis=(1, 2))
    logits = feat @ params["fc_w"].T + params["fc_b"]
    return logits, feat


if __name__ == "__main__":
    key = jax.random.PRNGKey(0)
    k_x, k_cw, k_cb, k_fw, k_fb = jax.random.split(key, 5)

    params = {
        "conv_w": jax.random.normal(k_cw, (3, 3, C_IN, C_FEAT), jnp.float32) * 0.1,
        "conv_b": jax.random.normal(k_cb, (C_FEAT,), jnp.float32) * 0.1,
        "fc_w":   jax.random.normal(k_fw, (N_CLASSES, C_FEAT), jnp.float32) * 0.05,
        "fc_b":   jax.random.normal(k_fb, (N_CLASSES,), jnp.float32) * 0.05,
    }

    x = jax.random.normal(k_x, (B, C_IN, H, W), jnp.float32)      # NCHW input

    logits, feature = custom_classifier_forward(x, params, return_features=True)
    logits = jax.block_until_ready(logits)
    feature = jax.block_until_ready(feature)

    ref_logits, ref_feat = reference_forward(x, params)
    assert logits.shape == (B, N_CLASSES)
    assert feature.shape == (B, C_FEAT)
    assert jnp.allclose(logits, ref_logits, rtol=1e-4, atol=1e-4)
    assert jnp.allclose(feature, ref_feat, rtol=1e-4, atol=1e-4)

    print("KERNEL_OK")
</pallas_src>

<mosaic_0001>
module attributes {stable_mosaic.version = 11 : i64} {
  func.func @fused_kernel(%arg0: i32, %arg1: memref<1x256x36xf32, #tpu.memory_space<vmem>>, %arg2: memref<36x128xf32, #tpu.memory_space<vmem>>, %arg3: memref<1x128xf32, #tpu.memory_space<vmem>>, %arg4: memref<128x128xf32, #tpu.memory_space<vmem>>, %arg5: memref<1x128xf32, #tpu.memory_space<vmem>>, %arg6: memref<1x1x128xf32, #tpu.memory_space<vmem>>, %arg7: memref<1x1x128xf32, #tpu.memory_space<vmem>>) attributes {dimension_semantics = [#tpu.dimension_semantics<parallel>], iteration_bounds = array<i64: 2>, scalar_prefetch = 0 : i64, scratch_operands = 0 : i64, tpu.core_type = #tpu.core_type<tc>, window_params = [{transform_indices = @transform_0, window_bounds = array<i64: 1, 256, 36>}, {pipeline_mode = #tpu.pipeline_mode<synchronous>, transform_indices = @transform_1, window_bounds = array<i64: 36, 128>}, {pipeline_mode = #tpu.pipeline_mode<synchronous>, transform_indices = @transform_2, window_bounds = array<i64: 1, 128>}, {pipeline_mode = #tpu.pipeline_mode<synchronous>, transform_indices = @transform_3, window_bounds = array<i64: 128, 128>}, {pipeline_mode = #tpu.pipeline_mode<synchronous>, transform_indices = @transform_4, window_bounds = array<i64: 1, 128>}, {transform_indices = @transform_5, window_bounds = array<i64: 1, 1, 128>}, {transform_indices = @transform_6, window_bounds = array<i64: 1, 1, 128>}]} {
    %c0 = arith.constant 0 : index
    %c0_0 = arith.constant 0 : index
    %c0_1 = arith.constant 0 : index
    %0 = vector.load %arg1[%c0, %c0_0, %c0_1] : memref<1x256x36xf32, #tpu.memory_space<vmem>>, vector<1x256x36xf32>
    %1 = vector.shape_cast %0 : vector<1x256x36xf32> to vector<256x36xf32>
    %c0_2 = arith.constant 0 : index
    %c0_3 = arith.constant 0 : index
    %2 = vector.load %arg2[%c0_2, %c0_3] : memref<36x128xf32, #tpu.memory_space<vmem>>, vector<36x128xf32>
    %cst = arith.constant dense<0.000000e+00> : vector<256x128xf32>
    %3 = tpu.matmul %1, %2, %cst {dimension_numbers = #tpu.dot_dimension_numbers<[1], [0], [0], [1], [0, 0, 1, 1], [], []>} : vector<256x36xf32>, vector<36x128xf32>, vector<256x128xf32> -> vector<256x128xf32>
    %c0_4 = arith.constant 0 : index
    %c0_5 = arith.constant 0 : index
    %4 = vector.load %arg3[%c0_4, %c0_5] : memref<1x128xf32, #tpu.memory_space<vmem>>, vector<1x128xf32>
    %5 = vector.broadcast %4 : vector<1x128xf32> to vector<256x128xf32>
    %6 = arith.addf %3, %5 : vector<256x128xf32>
    %cst_6 = arith.constant 0.000000e+00 : f32
    %7 = vector.broadcast %cst_6 : f32 to vector<256x128xf32>
    %8 = arith.maximumf %6, %7 : vector<256x128xf32>
    %cst_7 = arith.constant 3.906250e-03 : f32
    %9 = vector.broadcast %cst_7 : f32 to vector<1x256xf32>
    %cst_8 = arith.constant dense<0.000000e+00> : vector<1x128xf32>
    %10 = tpu.matmul %9, %8, %cst_8 {dimension_numbers = #tpu.dot_dimension_numbers<[1], [0], [0], [1], [0, 0, 1, 1], [], []>} : vector<1x256xf32>, vector<256x128xf32>, vector<1x128xf32> -> vector<1x128xf32>
    %c0_9 = arith.constant 0 : index
    %c0_10 = arith.constant 0 : index
    %c0_11 = arith.constant 0 : index
    %11 = vector.load %arg7[%c0_9, %c0_10, %c0_11] : memref<1x1x128xf32, #tpu.memory_space<vmem>>, vector<1x1x128xf32>
    %12 = vector.shape_cast %11 : vector<1x1x128xf32> to vector<1x128xf32>
    %13 = vector.shape_cast %10 : vector<1x128xf32> to vector<1x1x128xf32>
    tpu.vector_store %arg7[%c0_9, %c0_10, %c0_11], %13 {strides = array<i32>} : memref<1x1x128xf32, #tpu.memory_space<vmem>>, vector<1x1x128xf32>,
    %c0_12 = arith.constant 0 : index
    %c0_13 = arith.constant 0 : index
    %14 = vector.load %arg4[%c0_12, %c0_13] : memref<128x128xf32, #tpu.memory_space<vmem>>, vector<128x128xf32>
    %cst_14 = arith.constant dense<0.000000e+00> : vector<1x128xf32>
    %15 = tpu.matmul %10, %14, %cst_14 {dimension_numbers = #tpu.dot_dimension_numbers<[1], [0], [0], [1], [0, 0, 1, 1], [], []>} : vector<1x128xf32>, vector<128x128xf32>, vector<1x128xf32> -> vector<1x128xf32>
    %c0_15 = arith.constant 0 : index
    %c0_16 = arith.constant 0 : index
    %16 = vector.load %arg5[%c0_15, %c0_16] : memref<1x128xf32, #tpu.memory_space<vmem>>, vector<1x128xf32>
    %17 = arith.addf %15, %16 : vector<1x128xf32>
    %c0_17 = arith.constant 0 : index
    %c0_18 = arith.constant 0 : index
    %c0_19 = arith.constant 0 : index
    %18 = vector.load %arg6[%c0_17, %c0_18, %c0_19] : memref<1x1x128xf32, #tpu.memory_space<vmem>>, vector<1x1x128xf32>
    %19 = vector.shape_cast %18 : vector<1x1x128xf32> to vector<1x128xf32>
    %20 = vector.shape_cast %17 : vector<1x128xf32> to vector<1x1x128xf32>
    tpu.vector_store %arg6[%c0_17, %c0_18, %c0_19], %20 {strides = array<i32>} : memref<1x1x128xf32, #tpu.memory_space<vmem>>, vector<1x1x128xf32>,
    return
  }
  func.func @transform_0(%arg0: i32) -> (i32, i32, i32) {
    %c0_i32 = arith.constant 0 : i32
    %c0_i32_0 = arith.constant 0 : i32
    %c0_i32_1 = arith.constant 0 : i32
    return %arg0, %c0_i32, %c0_i32_0 : i32, i32, i32
  }
  func.func @transform_1(%arg0: i32) -> (i32, i32) {
    %c0_i32 = arith.constant 0 : i32
    %c0_i32_0 = arith.constant 0 : i32
    %c0_i32_1 = arith.constant 0 : i32
    return %c0_i32, %c0_i32_0 : i32, i32
  }
  func.func @transform_2(%arg0: i32) -> (i32, i32) {
    %c0_i32 = arith.constant 0 : i32
    %c0_i32_0 = arith.constant 0 : i32
    %c0_i32_1 = arith.constant 0 : i32
    return %c0_i32, %c0_i32_0 : i32, i32
  }
  func.func @transform_3(%arg0: i32) -> (i32, i32) {
    %c0_i32 = arith.constant 0 : i32
    %c0_i32_0 = arith.constant 0 : i32
    %c0_i32_1 = arith.constant 0 : i32
    return %c0_i32, %c0_i32_0 : i32, i32
  }
  func.func @transform_4(%arg0: i32) -> (i32, i32) {
    %c0_i32 = arith.constant 0 : i32
    %c0_i32_0 = arith.constant 0 : i32
    %c0_i32_1 = arith.constant 0 : i32
    return %c0_i32, %c0_i32_0 : i32, i32
  }
  func.func @transform_5(%arg0: i32) -> (i32, i32, i32) {
    %c0_i32 = arith.constant 0 : i32
    %c0_i32_0 = arith.constant 0 : i32
    %c0_i32_1 = arith.constant 0 : i32
    return %arg0, %c0_i32, %c0_i32_0 : i32, i32, i32
  }
  func.func @transform_6(%arg0: i32) -> (i32, i32, i32) {
    %c0_i32 = arith.constant 0 : i32
    %c0_i32_0 = arith.constant 0 : i32
    %c0_i32_1 = arith.constant 0 : i32
    return %arg0, %c0_i32, %c0_i32_0 : i32, i32, i32
  }
}

</mosaic_0001>

<llo_original>
// kernel: tpu_custom_call.1
$region0: #{tpu_custom_call.1}
  #allocation0 [shape = 'u32[]', space=smem, size = 0x4, offset = 0x4, fixed_abs, tag = 'smem constant byte address 0x4 - core index']
  #allocation1 [shape = 'u32[144,128]{1,0:T(1,128)}', space=vmem, size = 0x12000, scoped, tag = 'internal scratch']
  %s0 = inlined_call_operand.vmem [shape: f32[2,256,36], index: 0, kind: input, shape index: {}]
  %s1 = inlined_call_operand.vmem [shape: f32[36,128], index: 1, kind: input, shape index: {}]
  %s2 = inlined_call_operand.vmem [shape: f32[1,128], index: 2, kind: input, shape index: {}]
  %s3 = inlined_call_operand.vmem [shape: f32[128,128], index: 3, kind: input, shape index: {}]
  %s4 = inlined_call_operand.vmem [shape: f32[1,128], index: 4, kind: input, shape index: {}]
  %s5 = inlined_call_operand.hbm [shape: f32[2,1,128], index: 5, kind: output, shape index: {0}]
  %s6 = inlined_call_operand.hbm [shape: f32[2,1,128], index: 6, kind: output, shape index: {1}]
  %7 = xla_tuple %s5, %s6
  %s8 = sld [smem:[#allocation0]]
  $region61: #{tpu_custom_call.1} parent=0
    _
  %s10 = ssub.s32 1, %s8
  %s11 = scalar_select 0, %s10, %s8
  $region1: #{tpu_custom_call.1} parent=0
    #allocation2 [shape = 'u8[1024]{0}', space=vmem, size = 0x400, scoped, tag = 'output window, operand 0']
    #allocation3 [shape = 's32[2]{0}', space=sflag, size = 0x8, scoped, tag = 'scoped memory for tpu_custom_call.1']
    #allocation4 [shape = 'u8[1024]{0}', space=vmem, size = 0x400, scoped, tag = 'output window, operand 1']
    #allocation5 [shape = 's32[2]{0}', space=sflag, size = 0x8, scoped, tag = 'scoped memory for tpu_custom_call.1']
    %12 = vsyncpa [#allocation3], 0
    %s13 = scalar_lea.sflag [#allocation3], 1
    %14 = vsyncpa %s13, 0
    %15 = vsyncpa [#allocation5], 0
    %s16 = scalar_lea.sflag [#allocation5], 1
    %17 = vsyncpa %s16, 0
    loop: start=0, step=1, limit=4
    $region2: #{tpu_custom_call.1} parent=1 // loop_pre_header
      _
    $region3: #{tpu_custom_call.1} parent=1 // loop_header
      %s19 = sphi 0, %s23
      %p20 = scmp.ge.s32.totalorder %s19, 4
      %s29 = sphi 0, %s31
      %s32 = sphi 0, %s29
      %s33 = sphi 0, %s32
      %s49 = sphi 0, %s33
      %s53 = sphi 0, %s53
      %s55 = sphi 0, %s53
      %s56 = sphi 0, %s55
      %s70 = sphi 0, %s56
      %s74 = sphi 0, %s74
      %s76 = sphi 0, %s74
      %s77 = sphi 0, %s76
      %s91 = sphi 0, %s77
      %s95 = sphi 0, %s95
      %s97 = sphi 0, %s95
      %s98 = sphi 0, %s97
      %s112 = sphi 0, %s98
      %s116 = sphi 0, %s116
      %s118 = sphi 0, %s116
      %s119 = sphi 0, %s118
      %s133 = sphi 0, %s119
      %s139 = sphi 0, %s141
      %s142 = sphi 0, %s139
      %s143 = sphi 0, %s142
      %s159 = sphi 0, %s143
      %s165 = sphi 0, %s167
      %s168 = sphi 0, %s165
      %s169 = sphi 0, %s168
      %s185 = sphi 0, %s169
    $region4: #{tpu_custom_call.1} parent=1 // loop_header_branch
      %22 = sbr.rel (%p20) target = $region8
    $region5: #{tpu_custom_call.1} parent=1 // loop_body
      %s24 = ssub.s32 %s19, 1
      %s25 = ssub.s32 %s19, 2
      %s26 = sadd.s32 %s19, 1
      %s27 = ssub.s32 %s19, %s26
      %p28 = scmp.eq.s32.totalorder %s27, 0
      %s30 = sadd.s32 %s29, 1
      %s31 = scalar_select %p28, %s29, %s30
      %p34 = pneg %p28
      %p35 = scmp.eq.s32.totalorder %s19, 1
      %p36 = por %p34, %p35
      %p37 = scmp.ne.s32.totalorder %s29, %s32
      %p38 = scmp.eq.s32.totalorder %s19, 0
      %p39 = por %p37, %p38
      %p40 = scmp.ne.s32.totalorder %s29, %s32
      %p41 = scmp.eq.s32.totalorder %s24, 1
      %p42 = por %p40, %p41
      %p43 = scmp.ne.s32.totalorder %s32, %s33
      %p44 = scmp.eq.s32.totalorder %s24, 0
      %p45 = por %p43, %p44
      %p46 = scmp.ne.s32.totalorder %s32, %s33
      %p47 = scmp.eq.s32.totalorder %s25, 1
      %p48 = por %p46, %p47
      %p50 = scmp.ne.s32.totalorder %s33, %s49
      %p51 = scmp.eq.s32.totalorder %s25, 0
      %p52 = por %p50, %p51
      %s54 = sadd.s32 %s53, 1
      %p57 = scmp.eq.s32.totalorder %s19, 1
      %p58 = scmp.ne.s32.totalorder %s53, %s55
      %p59 = scmp.eq.s32.totalorder %s19, 0
      %p60 = por %p58, %p59
      %p61 = scmp.ne.s32.totalorder %s53, %s55
      %p62 = scmp.eq.s32.totalorder %s24, 1
      %p63 = por %p61, %p62
      %p64 = scmp.ne.s32.totalorder %s55, %s56
      %p65 = scmp.eq.s32.totalorder %s24, 0
      %p66 = por %p64, %p65
      %p67 = scmp.ne.s32.totalorder %s55, %s56
      %p68 = scmp.eq.s32.totalorder %s25, 1
      %p69 = por %p67, %p68
      %p71 = scmp.ne.s32.totalorder %s56, %s70
      %p72 = scmp.eq.s32.totalorder %s25, 0
      %p73 = por %p71, %p72
      %s75 = sadd.s32 %s74, 1
      %p78 = scmp.eq.s32.totalorder %s19, 1
      %p79 = scmp.ne.s32.totalorder %s74, %s76
      %p80 = scmp.eq.s32.totalorder %s19, 0
      %p81 = por %p79, %p80
      %p82 = scmp.ne.s32.totalorder %s74, %s76
      %p83 = scmp.eq.s32.totalorder %s24, 1
      %p84 = por %p82, %p83
      %p85 = scmp.ne.s32.totalorder %s76, %s77
      %p86 = scmp.eq.s32.totalorder %s24, 0
      %p87 = por %p85, %p86
      %p88 = scmp.ne.s32.totalorder %s76, %s77
      %p89 = scmp.eq.s32.totalorder %s25, 1
      %p90 = por %p88, %p89
      %p92 = scmp.ne.s32.totalorder %s77, %s91
      %p93 = scmp.eq.s32.totalorder %s25, 0
      %p94 = por %p92, %p93
      %s96 = sadd.s32 %s95, 1
      %p99 = scmp.eq.s32.totalorder %s19, 1
      %p100 = scmp.ne.s32.totalorder %s95, %s97
      %p101 = scmp.eq.s32.totalorder %s19, 0
      %p102 = por %p100, %p101
      %p103 = scmp.ne.s32.totalorder %s95, %s97
      %p104 = scmp.eq.s32.totalorder %s24, 1
      %p105 = por %p103, %p104
      %p106 = scmp.ne.s32.totalorder %s97, %s98
      %p107 = scmp.eq.s32.totalorder %s24, 0
      %p108 = por %p106, %p107
      %p109 = scmp.ne.s32.totalorder %s97, %s98
      %p110 = scmp.eq.s32.totalorder %s25, 1
      %p111 = por %p109, %p110
      %p113 = scmp.ne.s32.totalorder %s98, %s112
      %p114 = scmp.eq.s32.totalorder %s25, 0
      %p115 = por %p113, %p114
      %s117 = sadd.s32 %s116, 1
      %p120 = scmp.eq.s32.totalorder %s19, 1
      %p121 = scmp.ne.s32.totalorder %s116, %s118
      %p122 = scmp.eq.s32.totalorder %s19, 0
      %p123 = por %p121, %p122
      %p124 = scmp.ne.s32.totalorder %s116, %s118
      %p125 = scmp.eq.s32.totalorder %s24, 1
      %p126 = por %p124, %p125
      %p127 = scmp.ne.s32.totalorder %s118, %s119
      %p128 = scmp.eq.s32.totalorder %s24, 0
      %p129 = por %p127, %p128
      %p130 = scmp.ne.s32.totalorder %s118, %s119
      %p131 = scmp.eq.s32.totalorder %s25, 1
      %p132 = por %p130, %p131
      %p134 = scmp.ne.s32.totalorder %s119, %s133
      %p135 = scmp.eq.s32.totalorder %s25, 0
      %p136 = por %p134, %p135
      %s137 = ssub.s32 %s19, %s26
      %p138 = scmp.eq.s32.totalorder %s137, 0
      %s140 = sadd.s32 %s139, 1
      %s141 = scalar_select %p138, %s139, %s140
      %p144 = pneg %p138
      %p145 = scmp.eq.s32.totalorder %s19, 1
      %p146 = por %p144, %p145
      %p147 = scmp.ne.s32.totalorder %s139, %s142
      %p148 = scmp.eq.s32.totalorder %s19, 0
      %p149 = por %p147, %p148
      %p150 = scmp.ne.s32.totalorder %s139, %s142
      %p151 = scmp.eq.s32.totalorder %s24, 1
      %p152 = por %p150, %p151
      %p153 = scmp.ne.s32.totalorder %s142, %s143
      %p154 = scmp.eq.s32.totalorder %s24, 0
      %p155 = por %p153, %p154
      %p156 = scmp.ne.s32.totalorder %s142, %s143
      %p157 = scmp.eq.s32.totalorder %s25, 1
      %p158 = por %p156, %p157
      %p160 = scmp.ne.s32.totalorder %s143, %s159
      %p161 = scmp.eq.s32.totalorder %s25, 0
      %p162 = por %p160, %p161
      %s163 = ssub.s32 %s19, %s26
      %p164 = scmp.eq.s32.totalorder %s163, 0
      %s166 = sadd.s32 %s165, 1
      %s167 = scalar_select %p164, %s165, %s166
      %p170 = pneg %p164
      %p171 = scmp.eq.s32.totalorder %s19, 1
      %p172 = por %p170, %p171
      %p173 = scmp.ne.s32.totalorder %s165, %s168
      %p174 = scmp.eq.s32.totalorder %s19, 0
      %p175 = por %p173, %p174
      %p176 = scmp.ne.s32.totalorder %s165, %s168
      %p177 = scmp.eq.s32.totalorder %s24, 1
      %p178 = por %p176, %p177
      %p179 = scmp.ne.s32.totalorder %s168, %s169
      %p180 = scmp.eq.s32.totalorder %s24, 0
      %p181 = por %p179, %p180
      %p182 = scmp.ne.s32.totalorder %s168, %s169
      %p183 = scmp.eq.s32.totalorder %s25, 1
      %p184 = por %p182, %p183
      %p186 = scmp.ne.s32.totalorder %s169, %s185
      %p187 = scmp.eq.s32.totalorder %s25, 0
      %p188 = por %p186, %p187
      %p189 = scmp.le.s32.totalorder 1, %s19
      %p190 = scmp.lt.s32.totalorder %s19, 3
      %p191 = pnand %p189, %p190
      %p192 = pneg %p191
      // Predicated region
      $region9: #{tpu_custom_call.1} parent=5 // pred_check
        _
      $region10: #{tpu_custom_call.1} parent=5 // pred_check_branch
        %194 = sbr.rel (%p191) target = $region12
      $region11: #{tpu_custom_call.1} parent=5 // pred_region
        %s195 = ssub.s32 %s19, 1
        // Predicated region
        $region13: #{tpu_custom_call.1} parent=11 // pred_check
          %p196 = pneg %p66
        $region14: #{tpu_custom_call.1} parent=11 // pred_check_branch
          %198 = sbr.rel (%p196) target = $region16
        $region15: #{tpu_custom_call.1} parent=11 // pred_region
          _
        $region16: #{tpu_custom_call.1} parent=11 // pred_fallthru
          _
        // Predicated region
        $region17: #{tpu_custom_call.1} parent=11 // pred_check
          %p199 = pneg %p87
        $region18: #{tpu_custom_call.1} parent=11 // pred_check_branch
          %201 = sbr.rel (%p199) target = $region20
        $region19: #{tpu_custom_call.1} parent=11 // pred_region
          _
        $region20: #{tpu_custom_call.1} parent=11 // pred_fallthru
          _
        // Predicated region
        $region21: #{tpu_custom_call.1} parent=11 // pred_check
          %p202 = pneg %p108
        $region22: #{tpu_custom_call.1} parent=11 // pred_check_branch
          %204 = sbr.rel (%p202) target = $region24
        $region23: #{tpu_custom_call.1} parent=11 // pred_region
          _
        $region24: #{tpu_custom_call.1} parent=11 // pred_fallthru
          _
        // Predicated region
        $region25: #{tpu_custom_call.1} parent=11 // pred_check
          %p205 = pneg %p129
        $region26: #{tpu_custom_call.1} parent=11 // pred_check_branch
          %207 = sbr.rel (%p205) target = $region28
        $region27: #{tpu_custom_call.1} parent=11 // pred_region
          _
        $region28: #{tpu_custom_call.1} parent=11 // pred_fallthru
          _
      $region12: #{tpu_custom_call.1} parent=5 // pred_fallthru
        _
      %p208 = scmp.lt.s32.totalorder %s19, 2
      // Predicated region
      $region29: #{tpu_custom_call.1} parent=5 // pred_check
        %p209 = pneg %p208
      $region30: #{tpu_custom_call.1} parent=5 // pred_check_branch
        %211 = sbr.rel (%p209) target = $region32
      $region31: #{tpu_custom_call.1} parent=5 // pred_region
        // Predicated region
        $region33: #{tpu_custom_call.1} parent=31 // pred_check
          %p212 = pneg %p39
        $region34: #{tpu_custom_call.1} parent=31 // pred_check_branch
          %214 = sbr.rel (%p212) target = $region36
        $region35: #{tpu_custom_call.1} parent=31 // pred_region
          %p215 = scmp.lt.s32.totalorder %s19, 1
          %s216 = scalar_select %p215, %s19, 1
          %s217 = smul.addr %s216, 32
          %s218 = smul.addr %s217, 8
          %s219 = scalar_lea.vmem %s0, %s218
        $region36: #{tpu_custom_call.1} parent=31 // pred_fallthru
          _
      $region32: #{tpu_custom_call.1} parent=5 // pred_fallthru
        _
      %p220 = scmp.le.s32.totalorder 1, %s19
      %p221 = scmp.lt.s32.totalorder %s19, 3
      %p222 = pnand %p220, %p221
      %p223 = pneg %p222
      // Predicated region
      $region37: #{tpu_custom_call.1} parent=5 // pred_check
        _
      $region38: #{tpu_custom_call.1} parent=5 // pred_check_branch
        %225 = sbr.rel (%p222) target = $region40
      $region39: #{tpu_custom_call.1} parent=5 // pred_region
        %s226 = ssub.s32 %s19, 1
        %p227 = scmp.lt.s32.totalorder %s24, 1
        %s228 = scalar_select %p227, %s24, 1
        %s229 = smul.addr %s228, 32
        %s230 = smul.addr %s229, 8
        %s231 = scalar_lea.vmem %s0, %s230
        %p232 = pneg %p45
        %p233 = pneg %p42
        %p234 = pneg %p66
        %p235 = pneg %p63
        %p236 = pneg %p87
        %p237 = pneg %p84
        %p238 = pneg %p108
        %p239 = pneg %p105
        %p240 = pneg %p129
        %p241 = pneg %p126
        %p242 = pneg %p155
        %p243 = pneg %p152
        %s244 = sand.u32 %s142, 1
        %s245 = scalar_lea.sflag [#allocation3], %s244
        %s246 = sand.u32 %s142, 1
        %s247 = scalar_lea.vmem [#allocation2], %s246
        %p248 = pneg %p181
        %p249 = pneg %p178
        %s250 = sand.u32 %s168, 1
        %s251 = scalar_lea.sflag [#allocation5], %s250
        %s252 = sand.u32 %s168, 1
        %s253 = scalar_lea.vmem [#allocation4], %s252
        %p254 = scmp.lt.s32.totalorder %s24, 1
        %s255 = scalar_select %p254, %s24, 1
        %s256 = smul.addr %s255, 32
        %s257 = smul.addr %s256, 8
        %s258 = scalar_lea.vmem %s0, %s257
        %v259 = vld [vmem:[%s258] sm:$0xff]
        %v260 = vld [vmem:[%s258 + $0x8] sm:$0xff]
        %v261 = vld [vmem:[%s258 + $0x10] sm:$0xff]
        %v262 = vld [vmem:[%s258 + $0x18] sm:$0xff]
        %v263 = vld [vmem:[%s258 + $0x20] sm:$0xff]
        %v264 = vld [vmem:[%s258 + $0x28] sm:$0xff]
        %v265 = vld [vmem:[%s258 + $0x30] sm:$0xff]
        %v266 = vld [vmem:[%s258 + $0x38] sm:$0xff]
        %v267 = vld [vmem:[%s258 + $0x40] sm:$0xff]
        %v268 = vld [vmem:[%s258 + $0x48] sm:$0xff]
        %v269 = vld [vmem:[%s258 + $0x50] sm:$0xff]
        %v270 = vld [vmem:[%s258 + $0x58] sm:$0xff]
        %v271 = vld [vmem:[%s258 + $0x60] sm:$0xff]
        %v272 = vld [vmem:[%s258 + $0x68] sm:$0xff]
        %v273 = vld [vmem:[%s258 + $0x70] sm:$0xff]
        %v274 = vld [vmem:[%s258 + $0x78] sm:$0xff]
        %v275 = vld [vmem:[%s258 + $0x80] sm:$0xff]
        %v276 = vld [vmem:[%s258 + $0x88] sm:$0xff]
        %v277 = vld [vmem:[%s258 + $0x90] sm:$0xff]
        %v278 = vld [vmem:[%s258 + $0x98] sm:$0xff]
        %v279 = vld [vmem:[%s258 + $0xa0] sm:$0xff]
        %v280 = vld [vmem:[%s258 + $0xa8] sm:$0xff]
        %v281 = vld [vmem:[%s258 + $0xb0] sm:$0xff]
        %v282 = vld [vmem:[%s258 + $0xb8] sm:$0xff]
        %v283 = vld [vmem:[%s258 + $0xc0] sm:$0xff]
        %v284 = vld [vmem:[%s258 + $0xc8] sm:$0xff]
        %v285 = vld [vmem:[%s258 + $0xd0] sm:$0xff]
        %v286 = vld [vmem:[%s258 + $0xd8] sm:$0xff]
        %v287 = vld [vmem:[%s258 + $0xe0] sm:$0xff]
        %v288 = vld [vmem:[%s258 + $0xe8] sm:$0xff]
        %v289 = vld [vmem:[%s258 + $0xf0] sm:$0xff]
        %v290 = vld [vmem:[%s258 + $0xf8] sm:$0xff]
        %v291 = vld [vmem:[%s1] sm:$0xff]
        %v292 = vld [vmem:[%s1 + $0x8] sm:$0xff]
        %v293 = vld [vmem:[%s1 + $0x10] sm:$0xff]
        %v294 = vld [vmem:[%s1 + $0x18] sm:$0xff]
        %v295 = vld [vmem:[%s1 + $0x20] sm:$0xf]
        %v296 = vld [vmem:[%s2] sm:$0x1]
        %v298 = vlaneseq
        %v299 = vshrl.u32 %v298, 7
        %v300 = vsub.s32 0, %v299
        %v301 = vrot.slane %v296, %v300
        %vm303 = vcmask 293888
        %v305 = vsel %vm303, %v259, 0
        %v308 = vsel %vm303, %v260, 0
        %v311 = vsel %vm303, %v261, 0
        %v314 = vsel %vm303, %v262, 0
        %v317 = vsel %vm303, %v263, 0
        %v320 = vsel %vm303, %v264, 0
        %v323 = vsel %vm303, %v265, 0
        %v326 = vsel %vm303, %v266, 0
        %v329 = vsel %vm303, %v267, 0
        %v332 = vsel %vm303, %v268, 0
        %v335 = vsel %vm303, %v269, 0
        %v338 = vsel %vm303, %v270, 0
        %v341 = vsel %vm303, %v271, 0
        %v344 = vsel %vm303, %v272, 0
        %v347 = vsel %vm303, %v273, 0
        %v350 = vsel %vm303, %v274, 0
        %v353 = vsel %vm303, %v275, 0
        %v356 = vsel %vm303, %v276, 0
        %v359 = vsel %vm303, %v277, 0
        %v362 = vsel %vm303, %v278, 0
        %v365 = vsel %vm303, %v279, 0
        %v368 = vsel %vm303, %v280, 0
        %v371 = vsel %vm303, %v281, 0
        %v374 = vsel %vm303, %v282, 0
        %v377 = vsel %vm303, %v283, 0
        %v380 = vsel %vm303, %v284, 0
        %v383 = vsel %vm303, %v285, 0
        %v386 = vsel %vm303, %v286, 0
        %v389 = vsel %vm303, %v287, 0
        %v392 = vsel %vm303, %v288, 0
        %v395 = vsel %vm303, %v289, 0
        %v398 = vsel %vm303, %v290, 0
        %vm400 = vcmask 1043456
        %v402 = vsel %vm400, %v295, 0
        %404 = vmatprep.subr.mxu0 0.0
        %405 = vmatpush1.msra.mxu0 %v291
        %406 = vmatprep.subr.mxu0 0.0
        %407 = vmatpush1.msra.mxu0 %v292
        %408 = vmatprep.subr.mxu0 0.0
        %409 = vmatpush1.msra.mxu0 %v293
        %410 = vmatprep.subr.mxu0 0.0
        %411 = vmatpush1.msra.mxu0 %v294
        %412 = vmatprep.subr.mxu0 0.0
        %413 = vmatpush1.msra.mxu0 %v402
        %414 = vmatprep.subr.mxu0 0.0
        %415 = vmatpush1.msra.mxu0 0.0
        %416 = vmatprep.subr.mxu0 0.0
        %417 = vmatpush1.msra.mxu0 0.0
        %418 = vmatprep.subr.mxu0 0.0
        %419 = vmatpush1.msra.mxu0 0.0
        %420 = vmatprep.subr.mxu0 0.0
        %421 = vmatpush1.msra.mxu0 0.0
        %422 = vmatprep.subr.mxu0 0.0
        %423 = vmatpush1.msra.mxu0 0.0
        %424 = vmatprep.subr.mxu0 0.0
        %425 = vmatpush1.msra.mxu0 0.0
        %426 = vmatprep.subr.mxu0 0.0
        %427 = vmatpush1.msra.mxu0 0.0
        %428 = vmatprep.subr.mxu0 0.0
        %429 = vmatpush1.msra.mxu0 0.0
        %430 = vmatprep.subr.mxu0 0.0
        %431 = vmatpush1.msra.mxu0 0.0
        %432 = vmatprep.subr.mxu0 0.0
        %433 = vmatpush1.msra.mxu0 0.0
        %434 = vmatprep.subr.mxu0 0.0
        %435 = vmatpush1.msra.mxu0 0.0
        %436 = vmatprep.subr.mxu0 0.0
        %437 = vmatpush1.msra.mxu0 0.0
        %438 = vmatprep.subr.mxu0 0.0
        %439 = vmatpush1.msra.mxu0 0.0
        %440 = vmatprep.subr.mxu0 0.0
        %441 = vmatpush1.msra.mxu0 0.0
        %442 = vmatprep.subr.mxu0 0.0
        %443 = vmatpush1.msra.mxu0 0.0
        %444 = vmatprep.subr.mxu0 0.0
        %445 = vmatpush1.msra.mxu0 0.0
        %446 = vmatprep.subr.mxu0 0.0
        %447 = vmatpush1.msra.mxu0 0.0
        %448 = vmatprep.subr.mxu0 0.0
        %449 = vmatpush1.msra.mxu0 0.0
        %450 = vmatprep.subr.mxu0 0.0
        %451 = vmatpush1.msra.mxu0 0.0
        %452 = vmatprep.subr.mxu0 0.0
        %453 = vmatpush1.msra.mxu0 0.0
        %454 = vmatprep.subr.mxu0 0.0
        %455 = vmatpush1.msra.mxu0 0.0
        %456 = vmatprep.subr.mxu0 0.0
        %457 = vmatpush1.msra.mxu0 0.0
        %458 = vmatprep.subr.mxu0 0.0
        %459 = vmatpush1.msra.mxu0 0.0
        %460 = vmatprep.subr.mxu0 0.0
        %461 = vmatpush1.msra.mxu0 0.0
        %462 = vmatprep.subr.mxu0 0.0
        %463 = vmatpush1.msra.mxu0 0.0
        %464 = vmatprep.subr.mxu0 0.0
        %465 = vmatpush1.msra.mxu0 0.0
        %466 = vmatprep.subr.mxu0 0.0
        %467 = vmatpush1.msra.mxu0 0.0
        %468 = vmatprep.mubr.f32.mxu0 0.0
        %469 = vmatmul.mubr.f32.gmra.mrb[0].mxu0 %v305
        %v470 = vpop.f32.mrb[0].mxu0
        %v471 = vadd.f32 %v301, %v470
        %v472 = vpop.f32.mrb[0].mxu0
        %473 = vmatprep.mubr.f32.mxu0 0.0
        %474 = vmatmul.mubr.f32.gmra.mrb[0].mxu0 %v308
        %v475 = vpop.f32.mrb[0].mxu0
        %v476 = vadd.f32 %v301, %v475
        %v477 = vpop.f32.mrb[0].mxu0
        %478 = vmatprep.mubr.f32.mxu0 0.0
        %479 = vmatmul.mubr.f32.gmra.mrb[0].mxu0 %v311
        %v480 = vpop.f32.mrb[0].mxu0
        %v481 = vadd.f32 %v301, %v480
        %v482 = vpop.f32.mrb[0].mxu0
        %483 = vmatprep.mubr.f32.mxu0 0.0
        %484 = vmatmul.mubr.f32.gmra.mrb[0].mxu0 %v314
        %v485 = vpop.f32.mrb[0].mxu0
        %v486 = vadd.f32 %v301, %v485
        %v487 = vpop.f32.mrb[0].mxu0
        %488 = vmatprep.mubr.f32.mxu0 0.0
        %489 = vmatmul.mubr.f32.gmra.mrb[0].mxu0 %v317
        %v490 = vpop.f32.mrb[0].mxu0
        %v491 = vadd.f32 %v301, %v490
        %v492 = vpop.f32.mrb[0].mxu0
        %493 = vmatprep.mubr.f32.mxu0 0.0
        %494 = vmatmul.mubr.f32.gmra.mrb[0].mxu0 %v320
        %v495 = vpop.f32.mrb[0].mxu0
        %v496 = vadd.f32 %v301, %v495
        %v497 = vpop.f32.mrb[0].mxu0
        %498 = vmatprep.mubr.f32.mxu0 0.0
        %499 = vmatmul.mubr.f32.gmra.mrb[0].mxu0 %v323
        %v500 = vpop.f32.mrb[0].mxu0
        %v501 = vadd.f32 %v301, %v500
        %v502 = vpop.f32.mrb[0].mxu0
        %503 = vmatprep.mubr.f32.mxu0 0.0
        %504 = vmatmul.mubr.f32.gmra.mrb[0].mxu0 %v326
        %v505 = vpop.f32.mrb[0].mxu0
        %v506 = vadd.f32 %v301, %v505
        %v507 = vpop.f32.mrb[0].mxu0
        %508 = vmatprep.mubr.f32.mxu0 0.0
        %509 = vmatmul.mubr.f32.gmra.mrb[0].mxu0 %v329
        %v510 = vpop.f32.mrb[0].mxu0
        %v511 = vadd.f32 %v301, %v510
        %v512 = vpop.f32.mrb[0].mxu0
        %513 = vmatprep.mubr.f32.mxu0 0.0
        %514 = vmatmul.mubr.f32.gmra.mrb[0].mxu0 %v332
        %v515 = vpop.f32.mrb[0].mxu0
        %v516 = vadd.f32 %v301, %v515
        %v517 = vpop.f32.mrb[0].mxu0
        %518 = vmatprep.mubr.f32.mxu0 0.0
        %519 = vmatmul.mubr.f32.gmra.mrb[0].mxu0 %v335
        %v520 = vpop.f32.mrb[0].mxu0
        %v521 = vadd.f32 %v301, %v520
        %v522 = vpop.f32.mrb[0].mxu0
        %523 = vmatprep.mubr.f32.mxu0 0.0
        %524 = vmatmul.mubr.f32.gmra.mrb[0].mxu0 %v338
        %v525 = vpop.f32.mrb[0].mxu0
        %v526 = vadd.f32 %v301, %v525
        %v527 = vpop.f32.mrb[0].mxu0
        %528 = vmatprep.mubr.f32.mxu0 0.0
        %529 = vmatmul.mubr.f32.gmra.mrb[0].mxu0 %v341
        %v530 = vpop.f32.mrb[0].mxu0
        %v531 = vadd.f32 %v301, %v530
        %v532 = vpop.f32.mrb[0].mxu0
        %533 = vmatprep.mubr.f32.mxu0 0.0
        %534 = vmatmul.mubr.f32.gmra.mrb[0].mxu0 %v344
        %v535 = vpop.f32.mrb[0].mxu0
        %v536 = vadd.f32 %v301, %v535
        %v537 = vpop.f32.mrb[0].mxu0
        %538 = vmatprep.mubr.f32.mxu0 0.0
        %539 = vmatmul.mubr.f32.gmra.mrb[0].mxu0 %v347
        %v540 = vpop.f32.mrb[0].mxu0
        %v541 = vadd.f32 %v301, %v540
        %v542 = vpop.f32.mrb[0].mxu0
        %543 = vmatprep.mubr.f32.mxu0 0.0
        %544 = vmatmul.mubr.f32.gmra.mrb[0].mxu0 %v350
        %v545 = vpop.f32.mrb[0].mxu0
        %v546 = vadd.f32 %v301, %v545
        %v547 = vpop.f32.mrb[0].mxu0
        %548 = vmatprep.mubr.f32.mxu0 0.0
        %549 = vmatmul.mubr.f32.gmra.mrb[0].mxu0 %v353
        %v550 = vpop.f32.mrb[0].mxu0
        %v551 = vadd.f32 %v301, %v550
        %v552 = vpop.f32.mrb[0].mxu0
        %553 = vmatprep.mubr.f32.mxu0 0.0
        %554 = vmatmul.mubr.f32.gmra.mrb[0].mxu0 %v356
        %v555 = vpop.f32.mrb[0].mxu0
        %v556 = vadd.f32 %v301, %v555
        %v557 = vpop.f32.mrb[0].mxu0
        %558 = vmatprep.mubr.f32.mxu0 0.0
        %559 = vmatmul.mubr.f32.gmra.mrb[0].mxu0 %v359
        %v560 = vpop.f32.mrb[0].mxu0
        %v561 = vadd.f32 %v301, %v560
        %v562 = vpop.f32.mrb[0].mxu0
        %563 = vmatprep.mubr.f32.mxu0 0.0
        %564 = vmatmul.mubr.f32.gmra.mrb[0].mxu0 %v362
        %v565 = vpop.f32.mrb[0].mxu0
        %v566 = vadd.f32 %v301, %v565
        %v567 = vpop.f32.mrb[0].mxu0
        %568 = vmatprep.mubr.f32.mxu0 0.0
        %569 = vmatmul.mubr.f32.gmra.mrb[0].mxu0 %v365
        %v570 = vpop.f32.mrb[0].mxu0
        %v571 = vadd.f32 %v301, %v570
        %v572 = vpop.f32.mrb[0].mxu0
        %573 = vmatprep.mubr.f32.mxu0 0.0
        %574 = vmatmul.mubr.f32.gmra.mrb[0].mxu0 %v368
        %v575 = vpop.f32.mrb[0].mxu0
        %v576 = vadd.f32 %v301, %v575
        %v577 = vpop.f32.mrb[0].mxu0
        %578 = vmatprep.mubr.f32.mxu0 0.0
        %579 = vmatmul.mubr.f32.gmra.mrb[0].mxu0 %v371
        %v580 = vpop.f32.mrb[0].mxu0
        %v581 = vadd.f32 %v301, %v580
        %v582 = vpop.f32.mrb[0].mxu0
        %583 = vmatprep.mubr.f32.mxu0 0.0
        %584 = vmatmul.mubr.f32.gmra.mrb[0].mxu0 %v374
        %v585 = vpop.f32.mrb[0].mxu0
        %v586 = vadd.f32 %v301, %v585
        %v587 = vpop.f32.mrb[0].mxu0
        %588 = vmatprep.mubr.f32.mxu0 0.0
        %589 = vmatmul.mubr.f32.gmra.mrb[0].mxu0 %v377
        %v590 = vpop.f32.mrb[0].mxu0
        %v591 = vadd.f32 %v301, %v590
        %v592 = vpop.f32.mrb[0].mxu0
        %593 = vmatprep.mubr.f32.mxu0 0.0
        %594 = vmatmul.mubr.f32.gmra.mrb[0].mxu0 %v380
        %v595 = vpop.f32.mrb[0].mxu0
        %v596 = vadd.f32 %v301, %v595
        %v597 = vpop.f32.mrb[0].mxu0
        %598 = vmatprep.mubr.f32.mxu0 0.0
        %599 = vmatmul.mubr.f32.gmra.mrb[0].mxu0 %v383
        %v600 = vpop.f32.mrb[0].mxu0
        %v601 = vadd.f32 %v301, %v600
        %v602 = vpop.f32.mrb[0].mxu0
        %603 = vmatprep.mubr.f32.mxu0 0.0
        %604 = vmatmul.mubr.f32.gmra.mrb[0].mxu0 %v386
        %v605 = vpop.f32.mrb[0].mxu0
        %v606 = vadd.f32 %v301, %v605
        %v607 = vpop.f32.mrb[0].mxu0
        %608 = vmatprep.mubr.f32.mxu0 0.0
        %609 = vmatmul.mubr.f32.gmra.mrb[0].mxu0 %v389
        %v610 = vpop.f32.mrb[0].mxu0
        %v611 = vadd.f32 %v301, %v610
        %v612 = vpop.f32.mrb[0].mxu0
        %613 = vmatprep.mubr.f32.mxu0 0.0
        %614 = vmatmul.mubr.f32.gmra.mrb[0].mxu0 %v392
        %v615 = vpop.f32.mrb[0].mxu0
        %v616 = vadd.f32 %v301, %v615
        %v617 = vpop.f32.mrb[0].mxu0
        %618 = vmatprep.mubr.f32.mxu0 0.0
        %619 = vmatmul.mubr.f32.gmra.mrb[0].mxu0 %v395
        %v620 = vpop.f32.mrb[0].mxu0
        %v621 = vadd.f32 %v301, %v620
        %v622 = vpop.f32.mrb[0].mxu0
        %623 = vmatprep.mubr.f32.mxu0 0.0
        %624 = vmatmul.mubr.f32.gmra.mrb[0].mxu0 %v398
        %v625 = vpop.f32.mrb[0].mxu0
        %v626 = vadd.f32 %v301, %v625
        %v627 = vpop.f32.mrb[0].mxu0
        %628 = vdwg.mxu0
        %v629 = vmax.f32 %v471, 0.0
        %v630 = vmax.f32 %v476, 0.0
        %v631 = vmax.f32 %v481, 0.0
        %v632 = vmax.f32 %v486, 0.0
        %v633 = vmax.f32 %v491, 0.0
        %v634 = vmax.f32 %v496, 0.0
        %v635 = vmax.f32 %v501, 0.0
        %v636 = vmax.f32 %v506, 0.0
        %v637 = vmax.f32 %v511, 0.0
        %v638 = vmax.f32 %v516, 0.0
        %v639 = vmax.f32 %v521, 0.0
        %v640 = vmax.f32 %v526, 0.0
        %v641 = vmax.f32 %v531, 0.0
        %v642 = vmax.f32 %v536, 0.0
        %v643 = vmax.f32 %v541, 0.0
        %v644 = vmax.f32 %v546, 0.0
        %v645 = vmax.f32 %v551, 0.0
        %v646 = vmax.f32 %v556, 0.0
        %v647 = vmax.f32 %v561, 0.0
        %v648 = vmax.f32 %v566, 0.0
        %v649 = vmax.f32 %v571, 0.0
        %v650 = vmax.f32 %v576, 0.0
        %v651 = vmax.f32 %v581, 0.0
        %v652 = vmax.f32 %v586, 0.0
        %v653 = vmax.f32 %v591, 0.0
        %v654 = vmax.f32 %v596, 0.0
        %v655 = vmax.f32 %v601, 0.0
        %v656 = vmax.f32 %v606, 0.0
        %v657 = vmax.f32 %v611, 0.0
        %v658 = vmax.f32 %v616, 0.0
        %v659 = vmax.f32 %v621, 0.0
        %v660 = vmax.f32 %v626, 0.0
        %661 = vmatprep.subr.mxu0 0.0
        %662 = vmatpush1.msra.mxu0 %v629
        %663 = vmatprep.subr.mxu0 0.0
        %664 = vmatpush1.msra.mxu0 %v630
        %665 = vmatprep.subr.mxu0 0.0
        %666 = vmatpush1.msra.mxu0 %v631
        %667 = vmatprep.subr.mxu0 0.0
        %668 = vmatpush1.msra.mxu0 %v632
        %669 = vmatprep.subr.mxu0 0.0
        %670 = vmatpush1.msra.mxu0 %v633
        %671 = vmatprep.subr.mxu0 0.0
        %672 = vmatpush1.msra.mxu0 %v634
        %673 = vmatprep.subr.mxu0 0.0
        %674 = vmatpush1.msra.mxu0 %v635
        %675 = vmatprep.subr.mxu0 0.0
        %676 = vmatpush1.msra.mxu0 %v636
        %677 = vmatprep.subr.mxu0 0.0
        %678 = vmatpush1.msra.mxu0 %v637
        %679 = vmatprep.subr.mxu0 0.0
        %680 = vmatpush1.msra.mxu0 %v638
        %681 = vmatprep.subr.mxu0 0.0
        %682 = vmatpush1.msra.mxu0 %v639
        %683 = vmatprep.subr.mxu0 0.0
        %684 = vmatpush1.msra.mxu0 %v640
        %685 = vmatprep.subr.mxu0 0.0
        %686 = vmatpush1.msra.mxu0 %v641
        %687 = vmatprep.subr.mxu0 0.0
        %688 = vmatpush1.msra.mxu0 %v642
        %689 = vmatprep.subr.mxu0 0.0
        %690 = vmatpush1.msra.mxu0 %v643
        %691 = vmatprep.subr.mxu0 0.0
        %692 = vmatpush1.msra.mxu0 %v644
        %693 = vmatprep.subr.mxu0 0.0
        %694 = vmatpush1.msra.mxu0 %v645
        %695 = vmatprep.subr.mxu0 0.0
        %696 = vmatpush1.msra.mxu0 %v646
        %697 = vmatprep.subr.mxu0 0.0
        %698 = vmatpush1.msra.mxu0 %v647
        %699 = vmatprep.subr.mxu0 0.0
        %700 = vmatpush1.msra.mxu0 %v648
        %701 = vmatprep.subr.mxu0 0.0
        %702 = vmatpush1.msra.mxu0 %v649
        %703 = vmatprep.subr.mxu0 0.0
        %704 = vmatpush1.msra.mxu0 %v650
        %705 = vmatprep.subr.mxu0 0.0
        %706 = vmatpush1.msra.mxu0 %v651
        %707 = vmatprep.subr.mxu0 0.0
        %708 = vmatpush1.msra.mxu0 %v652
        %709 = vmatprep.subr.mxu0 0.0
        %710 = vmatpush1.msra.mxu0 %v653
        %711 = vmatprep.subr.mxu0 0.0
        %712 = vmatpush1.msra.mxu0 %v654
        %713 = vmatprep.subr.mxu0 0.0
        %714 = vmatpush1.msra.mxu0 %v655
        %715 = vmatprep.subr.mxu0 0.0
        %716 = vmatpush1.msra.mxu0 %v656
        %717 = vmatprep.subr.mxu0 0.0
        %718 = vmatpush1.msra.mxu0 %v657
        %719 = vmatprep.subr.mxu0 0.0
        %720 = vmatpush1.msra.mxu0 %v658
        %721 = vmatprep.subr.mxu0 0.0
        %722 = vmatpush1.msra.mxu0 %v659
        %723 = vmatprep.subr.mxu0 0.0
        %724 = vmatpush1.msra.mxu0 %v660
        %725 = vmatprep.mubr.f32.mxu0 0.00390625
        %726 = vmatmul.mubr.f32.gmra.mrb[0].mxu0 0.00390625
        %v727 = vpop.f32.mrb[0].mxu0
        %v728 = vadd.f32 0.0, %v727
        %v729 = vpop.f32.mrb[0].mxu0
        %730 = vdwg.mxu0
        %731 = vst [vmem:[%s253] sm:$0x1] %v728
        %v732 = vld [vmem:[%s3] sm:$0xff]
        %v733 = vld [vmem:[%s3 + $0x8] sm:$0xff]
        %v734 = vld [vmem:[%s3 + $0x10] sm:$0xff]
        %v735 = vld [vmem:[%s3 + $0x18] sm:$0xff]
        %v736 = vld [vmem:[%s3 + $0x20] sm:$0xff]
        %v737 = vld [vmem:[%s3 + $0x28] sm:$0xff]
        %v738 = vld [vmem:[%s3 + $0x30] sm:$0xff]
        %v739 = vld [vmem:[%s3 + $0x38] sm:$0xff]
        %v740 = vld [vmem:[%s3 + $0x40] sm:$0xff]
        %v741 = vld [vmem:[%s3 + $0x48] sm:$0xff]
        %v742 = vld [vmem:[%s3 + $0x50] sm:$0xff]
        %v743 = vld [vmem:[%s3 + $0x58] sm:$0xff]
        %v744 = vld [vmem:[%s3 + $0x60] sm:$0xff]
        %v745 = vld [vmem:[%s3 + $0x68] sm:$0xff]
        %v746 = vld [vmem:[%s3 + $0x70] sm:$0xff]
        %v747 = vld [vmem:[%s3 + $0x78] sm:$0xff]
        %v748 = vld [vmem:[%s4] sm:$0x1]
        %749 = vmatprep.subr.mxu0 0.0
        %750 = vmatpush1.msra.mxu0 %v732
        %751 = vmatprep.subr.mxu0 0.0
        %752 = vmatpush1.msra.mxu0 %v733
        %753 = vmatprep.subr.mxu0 0.0
        %754 = vmatpush1.msra.mxu0 %v734
        %755 = vmatprep.subr.mxu0 0.0
        %756 = vmatpush1.msra.mxu0 %v735
        %757 = vmatprep.subr.mxu0 0.0
        %758 = vmatpush1.msra.mxu0 %v736
        %759 = vmatprep.subr.mxu0 0.0
        %760 = vmatpush1.msra.mxu0 %v737
        %761 = vmatprep.subr.mxu0 0.0
        %762 = vmatpush1.msra.mxu0 %v738
        %763 = vmatprep.subr.mxu0 0.0
        %764 = vmatpush1.msra.mxu0 %v739
        %765 = vmatprep.subr.mxu0 0.0
        %766 = vmatpush1.msra.mxu0 %v740
        %767 = vmatprep.subr.mxu0 0.0
        %768 = vmatpush1.msra.mxu0 %v741
        %769 = vmatprep.subr.mxu0 0.0
        %770 = vmatpush1.msra.mxu0 %v742
        %771 = vmatprep.subr.mxu0 0.0
        %772 = vmatpush1.msra.mxu0 %v743
        %773 = vmatprep.subr.mxu0 0.0
        %774 = vmatpush1.msra.mxu0 %v744
        %775 = vmatprep.subr.mxu0 0.0
        %776 = vmatpush1.msra.mxu0 %v745
        %777 = vmatprep.subr.mxu0 0.0
        %778 = vmatpush1.msra.mxu0 %v746
        %779 = vmatprep.subr.mxu0 0.0
        %780 = vmatpush1.msra.mxu0 %v747
        %781 = vmatprep.subr.mxu0 0.0
        %782 = vmatpush1.msra.mxu0 0.0
        %783 = vmatprep.subr.mxu0 0.0
        %784 = vmatpush1.msra.mxu0 0.0
        %785 = vmatprep.subr.mxu0 0.0
        %786 = vmatpush1.msra.mxu0 0.0
        %787 = vmatprep.subr.mxu0 0.0
        %788 = vmatpush1.msra.mxu0 0.0
        %789 = vmatprep.subr.mxu0 0.0
        %790 = vmatpush1.msra.mxu0 0.0
        %791 = vmatprep.subr.mxu0 0.0
        %792 = vmatpush1.msra.mxu0 0.0
        %793 = vmatprep.subr.mxu0 0.0
        %794 = vmatpush1.msra.mxu0 0.0
        %795 = vmatprep.subr.mxu0 0.0
        %796 = vmatpush1.msra.mxu0 0.0
        %797 = vmatprep.subr.mxu0 0.0
        %798 = vmatpush1.msra.mxu0 0.0
        %799 = vmatprep.subr.mxu0 0.0
        %800 = vmatpush1.msra.mxu0 0.0
        %801 = vmatprep.subr.mxu0 0.0
        %802 = vmatpush1.msra.mxu0 0.0
        %803 = vmatprep.subr.mxu0 0.0
        %804 = vmatpush1.msra.mxu0 0.0
        %805 = vmatprep.subr.mxu0 0.0
        %806 = vmatpush1.msra.mxu0 0.0
        %807 = vmatprep.subr.mxu0 0.0
        %808 = vmatpush1.msra.mxu0 0.0
        %809 = vmatprep.subr.mxu0 0.0
        %810 = vmatpush1.msra.mxu0 0.0
        %811 = vmatprep.subr.mxu0 0.0
        %812 = vmatpush1.msra.mxu0 0.0
        %813 = vmatprep.mubr.f32.mxu0 0.0
        %814 = vmatmul.mubr.f32.gmra.mrb[0].mxu0 %v728
        %v815 = vpop.f32.mrb[0].mxu0
        %v816 = vadd.f32 %v748, %v815
        %v817 = vpop.f32.mrb[0].mxu0
        %818 = vdwg.mxu0
        %819 = vst [vmem:[%s247] sm:$0x1] %v816
        %s820 = sand.u32 %s142, 1
        %s821 = scalar_lea.sflag [#allocation3], %s820
        %s822 = sand.u32 %s142, 1
        %s823 = scalar_lea.vmem [#allocation2], %s822
        %s824 = sand.u32 %s168, 1
        %s825 = scalar_lea.sflag [#allocation5], %s824
        %s826 = sand.u32 %s168, 1
        %s827 = scalar_lea.vmem [#allocation4], %s826
        // Predicated region
        $region41: #{tpu_custom_call.1} parent=39 // pred_check
          %p828 = pneg %p152
        $region42: #{tpu_custom_call.1} parent=39 // pred_check_branch
          %830 = sbr.rel (%p828) target = $region44
        $region43: #{tpu_custom_call.1} parent=39 // pred_region
          %s832 = ssub.s32 16, 16
          %833 = vsyncadd %s821, %s832
          %s834 = smul.addr %s24, 16
          %s835 = scalar_lea.hbm %s5, %s834
          %s837 = sshll.u32 %s823, 4
          %s838 = int_to_ptr.vmem [resolvable:$true] %s837
          %840 = dma.vmem_to_hbm [thread:$0]  %s838, 16, %s835, %s821
        $region44: #{tpu_custom_call.1} parent=39 // pred_fallthru
          _
        // Predicated region
        $region45: #{tpu_custom_call.1} parent=39 // pred_check
          %p841 = pneg %p178
        $region46: #{tpu_custom_call.1} parent=39 // pred_check_branch
          %843 = sbr.rel (%p841) target = $region48
        $region47: #{tpu_custom_call.1} parent=39 // pred_region
          %s845 = ssub.s32 16, 16
          %846 = vsyncadd %s825, %s845
          %s847 = smul.addr %s24, 16
          %s848 = scalar_lea.hbm %s6, %s847
          %s850 = sshll.u32 %s827, 4
          %s851 = int_to_ptr.vmem [resolvable:$true] %s850
          %853 = dma.vmem_to_hbm [thread:$0]  %s851, 16, %s848, %s825
        $region48: #{tpu_custom_call.1} parent=39 // pred_fallthru
          _
      $region40: #{tpu_custom_call.1} parent=5 // pred_fallthru
        _
      %p854 = scmp.le.s32.totalorder 2, %s19
      // Predicated region
      $region49: #{tpu_custom_call.1} parent=5 // pred_check
        %p855 = pneg %p854
      $region50: #{tpu_custom_call.1} parent=5 // pred_check_branch
        %857 = sbr.rel (%p855) target = $region52
      $region51: #{tpu_custom_call.1} parent=5 // pred_region
        %s858 = ssub.s32 %s19, 2
        // Predicated region
        $region53: #{tpu_custom_call.1} parent=51 // pred_check
          %p859 = pneg %p158
        $region54: #{tpu_custom_call.1} parent=51 // pred_check_branch
          %861 = sbr.rel (%p859) target = $region56
        $region55: #{tpu_custom_call.1} parent=51 // pred_region
          %s862 = sand.u32 %s143, 1
          %s863 = scalar_lea.sflag [#allocation3], %s862
          %s864 = sand.u32 %s143, 1
          %s865 = scalar_lea.vmem [#allocation2], %s864
          %866 = dma.done %s863, 16
        $region56: #{tpu_custom_call.1} parent=51 // pred_fallthru
          _
        // Predicated region
        $region57: #{tpu_custom_call.1} parent=51 // pred_check
          %p867 = pneg %p184
        $region58: #{tpu_custom_call.1} parent=51 // pred_check_branch
          %869 = sbr.rel (%p867) target = $region60
        $region59: #{tpu_custom_call.1} parent=51 // pred_region
          %s870 = sand.u32 %s169, 1
          %s871 = scalar_lea.sflag [#allocation5], %s870
          %s872 = sand.u32 %s169, 1
          %s873 = scalar_lea.vmem [#allocation4], %s872
          %874 = dma.done %s871, 16
        $region60: #{tpu_custom_call.1} parent=51 // pred_fallthru
          _
      $region52: #{tpu_custom_call.1} parent=5 // pred_fallthru
        _
    $region6: #{tpu_custom_call.1} parent=1 // loop_footer
      %s23 = sadd.s32 1, %s19
    $region7: #{tpu_custom_call.1} parent=1 // loop_footer_branch
      %18 = sbr.rel target = $region3
    $region8: #{tpu_custom_call.1} parent=1 // loop_exit
      _
    %875 = vsyncpa [#allocation3], 1
    %s876 = scalar_lea.sflag [#allocation3], 1
    %877 = vsyncpa %s876, 1
    %878 = vsyncpa [#allocation5], 1
    %s879 = scalar_lea.sflag [#allocation5], 1
    %880 = vsyncpa %s879, 1

</llo_original>
